<compile_context>
chip_gen: v6e
topology: v6e:2x2x1
jax: 0.10.0
libtpu: 0.0.40
codegen_flags: <defaults>
</compile_context>

<pallas_src>
import functools

import jax
import jax.numpy as jnp
from jax.experimental import pallas as pl
from jax.experimental.pallas import tpu as pltpu

LANE = 128        # TPU lane width: hidden (32, 64) and output widths are zero-padded to this
MAX_TILE_B = 512  # batch tile (rows); ~85% of HBM roofline at 512-1024 for mem-bound kernels


def _round_up(n, m):
    return ((n + m - 1) // m) * m


def _pick_tile_b(batch, tile_b):
    """Batch-tile heuristic.

    * >=2 grid steps when the batch is large enough -> both v7x TensorCores engage
      (the extra ~0.35us/step is noise on 1-TC v5e/v6e).
    * multiple of 16 where possible (clean bf16 output packing).
    * never larger than the sublane-rounded batch (block never exceeds the array).
    """
    half = _round_up(max(1, (batch + 1) // 2), 16)
    tb = min(tile_b, half)
    tb = min(tb, _round_up(batch, 8))
    return max(8, tb)


def dqn_kernel(x_ref, w1_ref, w23_ref, b_ref, o_ref):
    """Fused 3-layer MLP on one batch tile.

    bf16 matmul operands -> MXU, f32 accumulation; bias add + ReLU in f32 (VPU-safe on v5e).
    """
    x = x_ref[...].astype(jnp.bfloat16)                               # (TB, S) cast in-register

    b1 = b_ref[0:1, :]                                                # (1, 128) f32
    b2 = b_ref[1:2, :]
    b3 = b_ref[2:3, :]

    h1 = jnp.dot(x, w1_ref[...], preferred_element_type=jnp.float32) + b1
    h1 = jnp.maximum(h1, 0.0)

    h2 = jnp.dot(h1.astype(jnp.bfloat16), w23_ref[0],
                 preferred_element_type=jnp.float32) + b2
    h2 = jnp.maximum(h2, 0.0)

    out = jnp.dot(h2.astype(jnp.bfloat16), w23_ref[1],
                  preferred_element_type=jnp.float32) + b3
    o_ref[...] = out.astype(o_ref.dtype)                              # lane-dense (TB, 128) bf16 store


def prep_dqn_params(params):
    """One-time layout prep (keep OUT of the per-call hot path).

    PyTorch layout (out,in) -> (in,out); hidden/output widths zero-padded to LANE
    (zero rows/cols keep the math exact); weights cast to bf16, biases stay f32.
    W2/W3 are stacked and the biases concatenated to cut the number of kernel inputs.
    """
    state_size = params["w1"].shape[1]
    action_size = params["w3"].shape[0]

    def pad_w(w_t, rows, cols):
        buf = jnp.zeros((rows, cols), jnp.float32)
        buf = buf.at[: w_t.shape[0], : w_t.shape[1]].set(w_t)
        return buf.astype(jnp.bfloat16)

    w1 = pad_w(params["w1"].T, state_size, LANE)                      # (S, 128)   bf16
    w2 = pad_w(params["w2"].T, LANE, LANE)                            # (128, 128) bf16
    w3 = pad_w(params["w3"].T, LANE, LANE)                            # (128, 128) bf16
    w23 = jnp.stack([w2, w3], axis=0)                                 # (2, 128, 128) bf16

    biases = jnp.zeros((3, LANE), jnp.float32)                        # (3, 128)   f32
    biases = biases.at[0, : params["b1"].shape[0]].set(params["b1"])
    biases = biases.at[1, : params["b2"].shape[0]].set(params["b2"])
    biases = biases.at[2, : params["b3"].shape[0]].set(params["b3"])

    return {"w1": w1, "w23": w23, "b": biases,
            "state_size": state_size, "action_size": action_size}


@functools.partial(jax.jit, static_argnames=("action_size", "tile_b"))
def _dqn_forward_jit(x, w1, w23, b, *, action_size, tile_b):
    batch, state_size = x.shape
    tb = _pick_tile_b(batch, tile_b)
    grid = pl.cdiv(batch, tb)

    out = pl.pallas_call(
        dqn_kernel,
        out_shape=jax.ShapeDtypeStruct((grid * tb, LANE), jnp.bfloat16),
        grid=(grid,),
        in_specs=[
            pl.BlockSpec((tb, state_size), lambda i: (i, 0)),         # x: pipelined batch tiles
            pl.BlockSpec((state_size, LANE), lambda i: (0, 0)),       # W1: VMEM-resident
            pl.BlockSpec((2, LANE, LANE), lambda i: (0, 0, 0)),       # W2/W3 stacked: resident
            pl.BlockSpec((3, LANE), lambda i: (0, 0)),                # biases: resident
        ],
        out_specs=pl.BlockSpec((tb, LANE), lambda i: (i, 0)),
        compiler_params=pltpu.CompilerParams(
            dimension_semantics=("parallel",)),                       # v7x: shard tiles over 2 TCs
    )(x, w1, w23, b)

    # Fused under jit: tiny (B, A) slice + cast, boundary-tile garbage rows dropped here.
    return out[:batch, :action_size].astype(jnp.float32)


def dqn_forward(x, prepped, *, tile_b=MAX_TILE_B):
    """x: (B, state_size) float32. prepped: output of prep_dqn_params."""
    return _dqn_forward_jit(x, prepped["w1"], prepped["w23"], prepped["b"],
                            action_size=prepped["action_size"], tile_b=tile_b)


def init_dqn_params(key, state_size, action_size):
    """PyTorch nn.Linear default init: U(-1/sqrt(fan_in), 1/sqrt(fan_in)), (out,in) layout."""
    def linear(key, fan_in, fan_out):
        kw, kb = jax.random.split(key)
        bound = 1.0 / jnp.sqrt(jnp.float32(fan_in))
        w = jax.random.uniform(kw, (fan_out, fan_in), jnp.float32, -bound, bound)
        b = jax.random.uniform(kb, (fan_out,), jnp.float32, -bound, bound)
        return w, b

    k1, k2, k3 = jax.random.split(key, 3)
    w1, b1 = linear(k1, state_size, 32)
    w2, b2 = linear(k2, 32, 64)
    w3, b3 = linear(k3, 64, action_size)
    return {"w1": w1, "b1": b1, "w2": w2, "b2": b2, "w3": w3, "b3": b3}


def dqn_reference(x, params):
    h1 = jnp.maximum(x @ params["w1"].T + params["b1"], 0.0)
    h2 = jnp.maximum(h1 @ params["w2"].T + params["b2"], 0.0)
    return h2 @ params["w3"].T + params["b3"]


if __name__ == "__main__":
    key = jax.random.PRNGKey(0)
    kp, kx = jax.random.split(key)

    batch = 8
    state_size = 16
    action_size = 4

    params = init_dqn_params(kp, state_size, action_size)
    prepped = prep_dqn_params(params)            # one-time layout prep (not in the hot path)
    x = jax.random.normal(kx, (batch, state_size), jnp.float32)

    out = jax.block_until_ready(dqn_forward(x, prepped))
    ref = dqn_reference(x, params)

    assert out.shape == (batch, action_size)
    # bf16 matmul operands + bf16 output stream vs f32 reference -> loosened tolerance.
    assert jnp.allclose(out, ref, atol=5e-2, rtol=5e-2), float(jnp.max(jnp.abs(out - ref)))

    print("KERNEL_OK")
</pallas_src>

<mosaic_0001>
module attributes {stable_mosaic.version = 11 : i64} {
  func.func @dqn_kernel(%arg0: i32, %arg1: memref<8x16xf32, #tpu.memory_space<vmem>>, %arg2: memref<16x128xbf16, #tpu.memory_space<vmem>>, %arg3: memref<2x128x128xbf16, #tpu.memory_space<vmem>>, %arg4: memref<3x128xf32, #tpu.memory_space<vmem>>, %arg5: memref<8x128xbf16, #tpu.memory_space<vmem>>) attributes {dimension_semantics = [#tpu.dimension_semantics<parallel>], iteration_bounds = array<i64: 1>, scalar_prefetch = 0 : i64, scratch_operands = 0 : i64, tpu.core_type = #tpu.core_type<tc>, window_params = [{transform_indices = @transform_0, window_bounds = array<i64: 8, 16>}, {pipeline_mode = #tpu.pipeline_mode<synchronous>, transform_indices = @transform_1, window_bounds = array<i64: 16, 128>}, {pipeline_mode = #tpu.pipeline_mode<synchronous>, transform_indices = @transform_2, window_bounds = array<i64: 2, 128, 128>}, {pipeline_mode = #tpu.pipeline_mode<synchronous>, transform_indices = @transform_3, window_bounds = array<i64: 3, 128>}, {transform_indices = @transform_4, window_bounds = array<i64: 8, 128>}]} {
    %c0 = arith.constant 0 : index
    %c0_0 = arith.constant 0 : index
    %0 = vector.load %arg1[%c0, %c0_0] : memref<8x16xf32, #tpu.memory_space<vmem>>, vector<8x16xf32>
    %1 = arith.truncf %0 : vector<8x16xf32> to vector<8x16xbf16>
    %c0_1 = arith.constant 0 : index
    %c0_2 = arith.constant 0 : index
    %2 = vector.load %arg4[%c0_1, %c0_2] : memref<3x128xf32, #tpu.memory_space<vmem>>, vector<1x128xf32>
    %c1 = arith.constant 1 : index
    %c0_3 = arith.constant 0 : index
    %3 = vector.load %arg4[%c1, %c0_3] : memref<3x128xf32, #tpu.memory_space<vmem>>, vector<1x128xf32>
    %c2 = arith.constant 2 : index
    %c0_4 = arith.constant 0 : index
    %4 = vector.load %arg4[%c2, %c0_4] : memref<3x128xf32, #tpu.memory_space<vmem>>, vector<1x128xf32>
    %c0_5 = arith.constant 0 : index
    %c0_6 = arith.constant 0 : index
    %5 = vector.load %arg2[%c0_5, %c0_6] : memref<16x128xbf16, #tpu.memory_space<vmem>>, vector<16x128xbf16>
    %cst = arith.constant dense<0.000000e+00> : vector<8x128xf32>
    %6 = tpu.matmul %1, %5, %cst {dimension_numbers = #tpu.dot_dimension_numbers<[1], [0], [0], [1], [0, 0, 1, 1], [], []>} : vector<8x16xbf16>, vector<16x128xbf16>, vector<8x128xf32> -> vector<8x128xf32>
    %7 = vector.broadcast %2 : vector<1x128xf32> to vector<8x128xf32>
    %8 = arith.addf %6, %7 : vector<8x128xf32>
    %cst_7 = arith.constant 0.000000e+00 : f32
    %9 = vector.broadcast %cst_7 : f32 to vector<8x128xf32>
    %10 = arith.maximumf %8, %9 : vector<8x128xf32>
    %11 = arith.truncf %10 : vector<8x128xf32> to vector<8x128xbf16>
    %c0_8 = arith.constant 0 : index
    %c0_9 = arith.constant 0 : index
    %c0_10 = arith.constant 0 : index
    %12 = vector.load %arg3[%c0_8, %c0_9, %c0_10] : memref<2x128x128xbf16, #tpu.memory_space<vmem>>, vector<1x128x128xbf16>
    %13 = vector.shape_cast %12 : vector<1x128x128xbf16> to vector<128x128xbf16>
    %cst_11 = arith.constant dense<0.000000e+00> : vector<8x128xf32>
    %14 = tpu.matmul %11, %13, %cst_11 {dimension_numbers = #tpu.dot_dimension_numbers<[1], [0], [0], [1], [0, 0, 1, 1], [], []>} : vector<8x128xbf16>, vector<128x128xbf16>, vector<8x128xf32> -> vector<8x128xf32>
    %15 = vector.broadcast %3 : vector<1x128xf32> to vector<8x128xf32>
    %16 = arith.addf %14, %15 : vector<8x128xf32>
    %cst_12 = arith.constant 0.000000e+00 : f32
    %17 = vector.broadcast %cst_12 : f32 to vector<8x128xf32>
    %18 = arith.maximumf %16, %17 : vector<8x128xf32>
    %19 = arith.truncf %18 : vector<8x128xf32> to vector<8x128xbf16>
    %c1_13 = arith.constant 1 : index
    %c0_14 = arith.constant 0 : index
    %c0_15 = arith.constant 0 : index
    %20 = vector.load %arg3[%c1_13, %c0_14, %c0_15] : memref<2x128x128xbf16, #tpu.memory_space<vmem>>, vector<1x128x128xbf16>
    %21 = vector.shape_cast %20 : vector<1x128x128xbf16> to vector<128x128xbf16>
    %cst_16 = arith.constant dense<0.000000e+00> : vector<8x128xf32>
    %22 = tpu.matmul %19, %21, %cst_16 {dimension_numbers = #tpu.dot_dimension_numbers<[1], [0], [0], [1], [0, 0, 1, 1], [], []>} : vector<8x128xbf16>, vector<128x128xbf16>, vector<8x128xf32> -> vector<8x128xf32>
    %23 = vector.broadcast %4 : vector<1x128xf32> to vector<8x128xf32>
    %24 = arith.addf %22, %23 : vector<8x128xf32>
    %25 = arith.truncf %24 : vector<8x128xf32> to vector<8x128xbf16>
    %c0_17 = arith.constant 0 : index
    %c0_18 = arith.constant 0 : index
    %26 = vector.load %arg5[%c0_17, %c0_18] : memref<8x128xbf16, #tpu.memory_space<vmem>>, vector<8x128xbf16>
    tpu.vector_store %arg5[%c0_17, %c0_18], %25 {strides = array<i32>} : memref<8x128xbf16, #tpu.memory_space<vmem>>, vector<8x128xbf16>,
    return
  }
  func.func @transform_0(%arg0: i32) -> (i32, i32) {
    %c0_i32 = arith.constant 0 : i32
    %c0_i32_0 = arith.constant 0 : i32
    return %arg0, %c0_i32 : i32, i32
  }
  func.func @transform_1(%arg0: i32) -> (i32, i32) {
    %c0_i32 = arith.constant 0 : i32
    %c0_i32_0 = arith.constant 0 : i32
    %c0_i32_1 = arith.constant 0 : i32
    return %c0_i32, %c0_i32_0 : i32, i32
  }
  func.func @transform_2(%arg0: i32) -> (i32, i32, i32) {
    %c0_i32 = arith.constant 0 : i32
    %c0_i32_0 = arith.constant 0 : i32
    %c0_i32_1 = arith.constant 0 : i32
    %c0_i32_2 = arith.constant 0 : i32
    return %c0_i32, %c0_i32_0, %c0_i32_1 : i32, i32, i32
  }
  func.func @transform_3(%arg0: i32) -> (i32, i32) {
    %c0_i32 = arith.constant 0 : i32
    %c0_i32_0 = arith.constant 0 : i32
    %c0_i32_1 = arith.constant 0 : i32
    return %c0_i32, %c0_i32_0 : i32, i32
  }
  func.func @transform_4(%arg0: i32) -> (i32, i32) {
    %c0_i32 = arith.constant 0 : i32
    %c0_i32_0 = arith.constant 0 : i32
    return %arg0, %c0_i32 : i32, i32
  }
}

</mosaic_0001>

<llo_original>
// kernel: _dqn_forward_jit.1
$region0: #{_dqn_forward_jit.1}
  #allocation0 [shape = 'u32[]', space=smem, size = 0x4, offset = 0x4, fixed_abs, tag = 'smem constant byte address 0x4 - core index']
  #allocation1 [shape = 'u32[144,128]{1,0:T(1,128)}', space=vmem, size = 0x12000, scoped, tag = 'internal scratch']
  %s0 = inlined_call_operand.hbm [shape: f32[8,16], index: 0, kind: input, shape index: {}]
  %s1 = inlined_call_operand.hbm [shape: bf16[16,128], index: 1, kind: input, shape index: {}]
  %s2 = inlined_call_operand.hbm [shape: bf16[2,128,128], index: 2, kind: input, shape index: {}]
  %s3 = inlined_call_operand.vmem [shape: f32[3,128], index: 3, kind: input, shape index: {}]
  %s4 = inlined_call_operand.vmem [shape: bf16[8,128], index: 4, kind: output, shape index: {}]
  %s5 = sld [smem:[#allocation0]]
  $region38: #{_dqn_forward_jit.1} parent=0
    _
  %s7 = ssub.s32 1, %s5
  %s8 = scalar_select 0, %s7, %s5
  $region1: #{_dqn_forward_jit.1} parent=0
    #allocation2 [shape = 'u8[4096]{0}', space=vmem, size = 0x1000, scoped, tag = 'input window, operand 0, single buffered']
    #allocation3 [shape = 's32[1]{0}', space=sflag, size = 0x4, scoped, tag = 'scoped memory for _dqn_forward_jit.1']
    #allocation4 [shape = 'u8[4096]{0}', space=vmem, size = 0x1000, scoped, tag = 'input window, operand 1, single buffered']
    #allocation5 [shape = 's32[1]{0}', space=sflag, size = 0x4, scoped, tag = 'scoped memory for _dqn_forward_jit.1']
    #allocation6 [shape = 'u8[65536]{0}', space=vmem, size = 0x10000, scoped, tag = 'input window, operand 2, single buffered']
    %9 = vsyncpa [#allocation3], 0
    %10 = vsyncpa [#allocation5], 0
    // Predicated region
    $region2: #{_dqn_forward_jit.1} parent=1 // pred_check
      _
    $region3: #{_dqn_forward_jit.1} parent=1 // pred_check_branch
      %12 = sbr.rel (0) target = $region5
    $region4: #{_dqn_forward_jit.1} parent=1 // pred_region
      %s14 = ssub.s32 128, 128
      %15 = vsyncadd [#allocation3], %s14
      %s17 = sshll.u32 [#allocation2], 4
      %s18 = int_to_ptr.vmem [resolvable:$true] %s17
      %20 = dma.hbm_to_vmem [thread:$0]  %s0, 128, %s18, [#allocation3]
    $region5: #{_dqn_forward_jit.1} parent=1 // pred_fallthru
      _
    // Predicated region
    $region6: #{_dqn_forward_jit.1} parent=1 // pred_check
      _
    $region7: #{_dqn_forward_jit.1} parent=1 // pred_check_branch
      %22 = sbr.rel (0) target = $region9
    $region8: #{_dqn_forward_jit.1} parent=1 // pred_region
      %s24 = ssub.s32 128, 128
      %25 = vsyncadd [#allocation5], %s24
      %s26 = sshll.u32 [#allocation4], 4
      %s27 = int_to_ptr.vmem [resolvable:$true] %s26
      %32 = dma.hbm_to_vmem [thread:$0]  %s1, 128, %s27, [#allocation5], 64, 64, 4
    $region9: #{_dqn_forward_jit.1} parent=1 // pred_fallthru
      _
    // Predicated region
    $region10: #{_dqn_forward_jit.1} parent=1 // pred_check
      _
    $region11: #{_dqn_forward_jit.1} parent=1 // pred_check_branch
      %34 = sbr.rel (0) target = $region13
    $region12: #{_dqn_forward_jit.1} parent=1 // pred_region
      %s36 = ssub.s32 2048, 2048
      %37 = vsyncadd [#allocation5], %s36
      %s38 = sshll.u32 [#allocation6], 4
      %s39 = int_to_ptr.vmem [resolvable:$true] %s38
      %44 = dma.hbm_to_vmem [thread:$0]  %s2, 2048, %s39, [#allocation5], 64, 64, 4
    $region13: #{_dqn_forward_jit.1} parent=1 // pred_fallthru
      _
    // Predicated region
    $region14: #{_dqn_forward_jit.1} parent=1 // pred_check
      _
    $region15: #{_dqn_forward_jit.1} parent=1 // pred_check_branch
      %46 = sbr.rel (0) target = $region17
    $region16: #{_dqn_forward_jit.1} parent=1 // pred_region
      _
    $region17: #{_dqn_forward_jit.1} parent=1 // pred_fallthru
      _
    // Predicated region
    $region18: #{_dqn_forward_jit.1} parent=1 // pred_check
      _
    $region19: #{_dqn_forward_jit.1} parent=1 // pred_check_branch
      %48 = sbr.rel (0) target = $region21
    $region20: #{_dqn_forward_jit.1} parent=1 // pred_region
      %49 = dma.done [#allocation3], 128
    $region21: #{_dqn_forward_jit.1} parent=1 // pred_fallthru
      _
    // Predicated region
    $region22: #{_dqn_forward_jit.1} parent=1 // pred_check
      _
    $region23: #{_dqn_forward_jit.1} parent=1 // pred_check_branch
      %51 = sbr.rel (0) target = $region25
    $region24: #{_dqn_forward_jit.1} parent=1 // pred_region
      %52 = dma.done [#allocation5], 128
    $region25: #{_dqn_forward_jit.1} parent=1 // pred_fallthru
      _
    // Predicated region
    $region26: #{_dqn_forward_jit.1} parent=1 // pred_check
      _
    $region27: #{_dqn_forward_jit.1} parent=1 // pred_check_branch
      %54 = sbr.rel (0) target = $region29
    $region28: #{_dqn_forward_jit.1} parent=1 // pred_region
      %55 = dma.done [#allocation5], 2048
    $region29: #{_dqn_forward_jit.1} parent=1 // pred_fallthru
      _
    %v57 = vld [vmem:[#allocation2] sm:$0xff]
    %v58 = vpack.c.bf16 %v57, %v57
    %v59 = vld [vmem:[%s3] sm:$0x1]
    %v60 = vld [vmem:[%s3 + $0x1] sm:$0x1]
    %v61 = vld [vmem:[%s3 + $0x2] sm:$0x1]
    %v62 = vld [vmem:[#allocation4] sm:$0xf]
    %v63 = vld [vmem:[#allocation4 + $0x4] sm:$0xf]
    %v64 = vlaneseq
    %v65 = vshrl.u32 %v64, 7
    %v66 = vsub.s32 0, %v65
    %v67 = vrot.slane %v59, %v66
    %v70 = vunpack.c.l.b16 %v62
    %v71 = vunpack.c.l.b16 %v63
    %v72 = vpack.c.b16 %v71, %v70
    %vm74 = vcmask 130048
    %v76 = vsel %vm74, %v58, 0
    %78 = vmatprep.subr.bf16.mxu0 0
    %79 = vmatpush1.bf16.msra.mxu0 0
    %80 = vmatprep.subr.bf16.mxu0 0
    %81 = vmatpush1.bf16.msra.mxu0 0
    %82 = vmatprep.subr.bf16.mxu0 0
    %83 = vmatpush1.bf16.msra.mxu0 0
    %84 = vmatprep.subr.bf16.mxu0 0
    %85 = vmatpush1.bf16.msra.mxu0 0
    %86 = vmatprep.subr.bf16.mxu0 0
    %87 = vmatpush1.bf16.msra.mxu0 0
    %88 = vmatprep.subr.bf16.mxu0 0
    %89 = vmatpush1.bf16.msra.mxu0 0
    %90 = vmatprep.subr.bf16.mxu0 0
    %91 = vmatpush1.bf16.msra.mxu0 0
    %92 = vmatprep.subr.bf16.mxu0 0
    %93 = vmatpush1.bf16.msra.mxu0 %v72
    %94 = vmatprep.subr.bf16.mxu0 0
    %95 = vmatpush2.bf16.msra.mxu0 0
    %96 = vmatprep.subr.bf16.mxu0 0
    %97 = vmatpush2.bf16.msra.mxu0 0
    %98 = vmatprep.subr.bf16.mxu0 0
    %99 = vmatpush2.bf16.msra.mxu0 0
    %100 = vmatprep.subr.bf16.mxu0 0
    %101 = vmatpush2.bf16.msra.mxu0 0
    %102 = vmatprep.subr.bf16.mxu0 0
    %103 = vmatpush2.bf16.msra.mxu0 0
    %104 = vmatprep.subr.bf16.mxu0 0
    %105 = vmatpush2.bf16.msra.mxu0 0
    %106 = vmatprep.subr.bf16.mxu0 0
    %107 = vmatpush2.bf16.msra.mxu0 0
    %108 = vmatprep.subr.bf16.mxu0 0
    %109 = vmatpush2.bf16.msra.mxu0 0
    %110 = vmatprep.mubr.bf16.mxu0 0
    %111 = vmatmul.mubr.bf16.gmra.mxu0 %v76
    %v112 = vpop.f32.mrf.mxu0
    %v113 = vadd.f32 %v67, %v112
    %v114 = vpop.f32.mrf.mxu0
    %v115 = vpop.f32.mrf.mxu0
    %v116 = vpop.f32.mrf.mxu0
    %117 = vdwg.mxu0
    %v118 = vmax.f32 %v113, 0.0
    %v119 = vpack.c.bf16 %v118, %v118
    %v120 = vld [vmem:[#allocation6] sm:$0xf]
    %v121 = vld [vmem:[#allocation6 + $0x4] sm:$0xf]
    %v122 = vld [vmem:[#allocation6 + $0x8] sm:$0xf]
    %v123 = vld [vmem:[#allocation6 + $0xc] sm:$0xf]
    %v124 = vld [vmem:[#allocation6 + $0x10] sm:$0xf]
    %v125 = vld [vmem:[#allocation6 + $0x14] sm:$0xf]
    %v126 = vld [vmem:[#allocation6 + $0x18] sm:$0xf]
    %v127 = vld [vmem:[#allocation6 + $0x1c] sm:$0xf]
    %v128 = vld [vmem:[#allocation6 + $0x20] sm:$0xf]
    %v129 = vld [vmem:[#allocation6 + $0x24] sm:$0xf]
    %v130 = vld [vmem:[#allocation6 + $0x28] sm:$0xf]
    %v131 = vld [vmem:[#allocation6 + $0x2c] sm:$0xf]
    %v132 = vld [vmem:[#allocation6 + $0x30] sm:$0xf]
    %v133 = vld [vmem:[#allocation6 + $0x34] sm:$0xf]
    %v134 = vld [vmem:[#allocation6 + $0x38] sm:$0xf]
    %v135 = vld [vmem:[#allocation6 + $0x3c] sm:$0xf]
    %v136 = vlaneseq
    %v137 = vshrl.u32 %v136, 7
    %v138 = vsub.s32 0, %v137
    %v139 = vrot.slane %v60, %v138
    %v156 = vunpack.c.l.b16 %v120
    %v157 = vunpack.c.l.b16 %v121
    %v158 = vunpack.c.l.b16 %v122
    %v159 = vunpack.c.l.b16 %v123
    %v160 = vunpack.c.l.b16 %v124
    %v161 = vunpack.c.l.b16 %v125
    %v162 = vunpack.c.l.b16 %v126
    %v163 = vunpack.c.l.b16 %v127
    %v164 = vunpack.c.l.b16 %v128
    %v165 = vunpack.c.l.b16 %v129
    %v166 = vunpack.c.l.b16 %v130
    %v167 = vunpack.c.l.b16 %v131
    %v168 = vunpack.c.l.b16 %v132
    %v169 = vunpack.c.l.b16 %v133
    %v170 = vunpack.c.l.b16 %v134
    %v171 = vunpack.c.l.b16 %v135
    %v172 = vpack.c.b16 %v157, %v156
    %v173 = vpack.c.b16 %v159, %v158
    %v174 = vpack.c.b16 %v161, %v160
    %v175 = vpack.c.b16 %v163, %v162
    %v176 = vpack.c.b16 %v165, %v164
    %v177 = vpack.c.b16 %v167, %v166
    %v178 = vpack.c.b16 %v169, %v168
    %v179 = vpack.c.b16 %v171, %v170
    %188 = vmatprep.subr.bf16.mxu0 0
    %189 = vmatpush1.bf16.msra.mxu0 %v179
    %190 = vmatprep.subr.bf16.mxu0 0
    %191 = vmatpush1.bf16.msra.mxu0 %v178
    %192 = vmatprep.subr.bf16.mxu0 0
    %193 = vmatpush1.bf16.msra.mxu0 %v177
    %194 = vmatprep.subr.bf16.mxu0 0
    %195 = vmatpush1.bf16.msra.mxu0 %v176
    %196 = vmatprep.subr.bf16.mxu0 0
    %197 = vmatpush1.bf16.msra.mxu0 %v175
    %198 = vmatprep.subr.bf16.mxu0 0
    %199 = vmatpush1.bf16.msra.mxu0 %v174
    %200 = vmatprep.subr.bf16.mxu0 0
    %201 = vmatpush1.bf16.msra.mxu0 %v173
    %202 = vmatprep.subr.bf16.mxu0 0
    %203 = vmatpush1.bf16.msra.mxu0 %v172
    %204 = vmatprep.subr.bf16.mxu0 0
    %205 = vmatpush2.bf16.msra.mxu0 0
    %206 = vmatprep.subr.bf16.mxu0 0
    %207 = vmatpush2.bf16.msra.mxu0 0
    %208 = vmatprep.subr.bf16.mxu0 0
    %209 = vmatpush2.bf16.msra.mxu0 0
    %210 = vmatprep.subr.bf16.mxu0 0
    %211 = vmatpush2.bf16.msra.mxu0 0
    %212 = vmatprep.subr.bf16.mxu0 0
    %213 = vmatpush2.bf16.msra.mxu0 0
    %214 = vmatprep.subr.bf16.mxu0 0
    %215 = vmatpush2.bf16.msra.mxu0 0
    %216 = vmatprep.subr.bf16.mxu0 0
    %217 = vmatpush2.bf16.msra.mxu0 0
    %218 = vmatprep.subr.bf16.mxu0 0
    %219 = vmatpush2.bf16.msra.mxu0 0
    %220 = vmatprep.mubr.bf16.mxu0 0
    %221 = vmatmul.mubr.bf16.gmra.mxu0 %v119
    %v222 = vpop.f32.mrf.mxu0
    %v223 = vadd.f32 %v139, %v222
    %v224 = vpop.f32.mrf.mxu0
    %v225 = vpop.f32.mrf.mxu0
    %v226 = vpop.f32.mrf.mxu0
    %227 = vdwg.mxu0
    %v228 = vmax.f32 %v223, 0.0
    %v229 = vpack.c.bf16 %v228, %v228
    %s230 = scalar_lea.vmem [#allocation6], 64
    %v231 = vld [vmem:[%s230] sm:$0xf]
    %v232 = vld [vmem:[%s230 + $0x4] sm:$0xf]
    %v233 = vld [vmem:[%s230 + $0x8] sm:$0xf]
    %v234 = vld [vmem:[%s230 + $0xc] sm:$0xf]
    %v235 = vld [vmem:[%s230 + $0x10] sm:$0xf]
    %v236 = vld [vmem:[%s230 + $0x14] sm:$0xf]
    %v237 = vld [vmem:[%s230 + $0x18] sm:$0xf]
    %v238 = vld [vmem:[%s230 + $0x1c] sm:$0xf]
    %v239 = vld [vmem:[%s230 + $0x20] sm:$0xf]
    %v240 = vld [vmem:[%s230 + $0x24] sm:$0xf]
    %v241 = vld [vmem:[%s230 + $0x28] sm:$0xf]
    %v242 = vld [vmem:[%s230 + $0x2c] sm:$0xf]
    %v243 = vld [vmem:[%s230 + $0x30] sm:$0xf]
    %v244 = vld [vmem:[%s230 + $0x34] sm:$0xf]
    %v245 = vld [vmem:[%s230 + $0x38] sm:$0xf]
    %v246 = vld [vmem:[%s230 + $0x3c] sm:$0xf]
    %v247 = vlaneseq
    %v248 = vshrl.u32 %v247, 7
    %v249 = vsub.s32 0, %v248
    %v250 = vrot.slane %v61, %v249
    %v267 = vunpack.c.l.b16 %v231
    %v268 = vunpack.c.l.b16 %v232
    %v269 = vunpack.c.l.b16 %v233
    %v270 = vunpack.c.l.b16 %v234
    %v271 = vunpack.c.l.b16 %v235
    %v272 = vunpack.c.l.b16 %v236
    %v273 = vunpack.c.l.b16 %v237
    %v274 = vunpack.c.l.b16 %v238
    %v275 = vunpack.c.l.b16 %v239
    %v276 = vunpack.c.l.b16 %v240
    %v277 = vunpack.c.l.b16 %v241
    %v278 = vunpack.c.l.b16 %v242
    %v279 = vunpack.c.l.b16 %v243
    %v280 = vunpack.c.l.b16 %v244
    %v281 = vunpack.c.l.b16 %v245
    %v282 = vunpack.c.l.b16 %v246
    %v283 = vpack.c.b16 %v268, %v267
    %v284 = vpack.c.b16 %v270, %v269
    %v285 = vpack.c.b16 %v272, %v271
    %v286 = vpack.c.b16 %v274, %v273
    %v287 = vpack.c.b16 %v276, %v275
    %v288 = vpack.c.b16 %v278, %v277
    %v289 = vpack.c.b16 %v280, %v279
    %v290 = vpack.c.b16 %v282, %v281
    %299 = vmatprep.subr.bf16.mxu0 0
    %300 = vmatpush1.bf16.msra.mxu0 %v290
    %301 = vmatprep.subr.bf16.mxu0 0
    %302 = vmatpush1.bf16.msra.mxu0 %v289
    %303 = vmatprep.subr.bf16.mxu0 0
    %304 = vmatpush1.bf16.msra.mxu0 %v288
    %305 = vmatprep.subr.bf16.mxu0 0
    %306 = vmatpush1.bf16.msra.mxu0 %v287
    %307 = vmatprep.subr.bf16.mxu0 0
    %308 = vmatpush1.bf16.msra.mxu0 %v286
    %309 = vmatprep.subr.bf16.mxu0 0
    %310 = vmatpush1.bf16.msra.mxu0 %v285
    %311 = vmatprep.subr.bf16.mxu0 0
    %312 = vmatpush1.bf16.msra.mxu0 %v284
    %313 = vmatprep.subr.bf16.mxu0 0
    %314 = vmatpush1.bf16.msra.mxu0 %v283
    %315 = vmatprep.subr.bf16.mxu0 0
    %316 = vmatpush2.bf16.msra.mxu0 0
    %317 = vmatprep.subr.bf16.mxu0 0
    %318 = vmatpush2.bf16.msra.mxu0 0
    %319 = vmatprep.subr.bf16.mxu0 0
    %320 = vmatpush2.bf16.msra.mxu0 0
    %321 = vmatprep.subr.bf16.mxu0 0
    %322 = vmatpush2.bf16.msra.mxu0 0
    %323 = vmatprep.subr.bf16.mxu0 0
    %324 = vmatpush2.bf16.msra.mxu0 0
    %325 = vmatprep.subr.bf16.mxu0 0
    %326 = vmatpush2.bf16.msra.mxu0 0
    %327 = vmatprep.subr.bf16.mxu0 0
    %328 = vmatpush2.bf16.msra.mxu0 0
    %329 = vmatprep.subr.bf16.mxu0 0
    %330 = vmatpush2.bf16.msra.mxu0 0
    %331 = vmatprep.mubr.bf16.mxu0 0
    %332 = vmatmul.mubr.bf16.gmra.mxu0 %v229
    %v333 = vpop.f32.mrf.mxu0
    %v334 = vadd.f32 %v250, %v333
    %v335 = vpop.f32.mrf.mxu0
    %v336 = vpop.f32.mrf.mxu0
    %v337 = vpop.f32.mrf.mxu0
    %338 = vdwg.mxu0
    %v339 = vpack.c.bf16 %v334, %v334
    %340 = vst [vmem:[%s4] sm:$0xf] %v339
    // Predicated region
    $region30: #{_dqn_forward_jit.1} parent=1 // pred_check
      _
    $region31: #{_dqn_forward_jit.1} parent=1 // pred_check_branch
      %342 = sbr.rel (0) target = $region33
    $region32: #{_dqn_forward_jit.1} parent=1 // pred_region
      _
    $region33: #{_dqn_forward_jit.1} parent=1 // pred_fallthru
      _
    // Predicated region
    $region34: #{_dqn_forward_jit.1} parent=1 // pred_check
      _
    $region35: #{_dqn_forward_jit.1} parent=1 // pred_check_branch
      %344 = sbr.rel (0) target = $region37
    $region36: #{_dqn_forward_jit.1} parent=1 // pred_region
      _
    $region37: #{_dqn_forward_jit.1} parent=1 // pred_fallthru
      _
    %345 = vsyncpa [#allocation3], 1
    %346 = vsyncpa [#allocation5], 1

</llo_original>
